<compile_context>
chip_gen: v6e
topology: v6e:2x2x1
jax: 0.10.0
libtpu: 0.0.40
codegen_flags: <defaults>
</compile_context>

<pallas_src>
import functools

import jax
import jax.numpy as jnp
from jax.experimental import pallas as pl
from jax.experimental.pallas import tpu as pltpu


def _fcn_kernel(xT_ref, w_in_ref, b_in_ref, wh_ref, bh_ref, w_out_t_ref, b_out_ref,
                o_ref):
    # Feature-major layout: batch on the lane (last) axis.
    # xT_ref:      (N_IN, TB)
    # w_in_ref:    (H, N_IN)        b_in_ref:  (H, 1)
    # wh_ref:      (L-1, H, H)      bh_ref:    (L-1, H, 1)
    # w_out_t_ref: (H, N_OUT)       b_out_ref: (N_OUT, 1)
    # o_ref:       (N_OUT, TB)   <- lane-dense store (TB multiple of 128)
    n_in = w_in_ref.shape[1]
    n_out = w_out_t_ref.shape[1]
    n_hidden_layers = wh_ref.shape[0]

    xT = xT_ref[...]

    # ---- input layer + tanh -> (H, TB) ----
    if n_in == 1:
        # K=1 contraction is just an outer product: do it on the VPU
        # (broadcast multiply-add) instead of paying an MXU push/pop.
        h = jnp.tanh(w_in_ref[...] * xT + b_in_ref[...])
    else:
        h = jnp.tanh(
            jnp.dot(w_in_ref[...], xT, preferred_element_type=jnp.float32)
            + b_in_ref[...]
        )

    # ---- hidden layers + tanh (statically unrolled, L-1 is small & known) ----
    for l in range(n_hidden_layers):
        h = jnp.tanh(
            jnp.dot(wh_ref[l], h, preferred_element_type=jnp.float32)
            + bh_ref[l]
        )

    # ---- output layer (no activation) -> (N_OUT, TB) ----
    if n_out == 1:
        # M=1 matmul -> VPU multiply + XLU sublane reduce instead of MXU.
        o_ref[...] = (
            jnp.sum(w_out_t_ref[...] * h, axis=0, keepdims=True) + b_out_ref[...]
        )
    else:
        o_ref[...] = (
            jax.lax.dot_general(
                w_out_t_ref[...], h, (((0,), (0,)), ((), ())),
                preferred_element_type=jnp.float32,
            )
            + b_out_ref[...]
        )


@functools.partial(jax.jit, static_argnames=("max_batch_tile",))
def fcn_forward(x, params, *, max_batch_tile=8192):
    """FCN forward as one fused Pallas kernel, feature-major, single grid step.

    x:      (B, N_IN) float32 (PyTorch convention).
    params: weights in PyTorch (out_features, in_features) layout, biases (out, 1).
    Returns (B, N_OUT) float32.
    """
    w_in, b_in, wh, bh, w_out, b_out = params
    B, n_in = x.shape
    n_hidden = w_in.shape[0]
    n_out = w_out.shape[0]
    n_hidden_layers = wh.shape[0]

    assert max_batch_tile % 128 == 0, "max_batch_tile must be a multiple of 128"

    # Whole problem is KB-scale: default to a single grid step (batch_tile =
    # padded batch).  Only tile if B outgrows max_batch_tile (then the parallel
    # grid lets v7x's two TensorCores split the work).
    padded_b = ((B + 127) // 128) * 128
    batch_tile = min(padded_b, max_batch_tile)
    padded_b = ((padded_b + batch_tile - 1) // batch_tile) * batch_tile
    grid = (padded_b // batch_tile,)

    # Pad + transpose once (tiny fused XLA ops under jit); kernel sees batch on
    # the lane axis.  Zero-padded columns only pass through bounded tanh and are
    # sliced off below.
    xT = jnp.pad(x.T, ((0, 0), (0, padded_b - B)))
    w_out_t = w_out.T  # (H, N_OUT); avoids an in-kernel transpose

    outT = pl.pallas_call(
        _fcn_kernel,
        out_shape=jax.ShapeDtypeStruct((n_out, padded_b), jnp.float32),
        grid_spec=pl.GridSpec(
            grid=grid,
            in_specs=[
                pl.BlockSpec((n_in, batch_tile), lambda i: (0, i)),           # x^T tile
                pl.BlockSpec((n_hidden, n_in), lambda i: (0, 0)),             # W_in
                pl.BlockSpec((n_hidden, 1), lambda i: (0, 0)),                # b_in
                pl.BlockSpec((n_hidden_layers, n_hidden, n_hidden),
                             lambda i: (0, 0, 0)),                            # W_h stack
                pl.BlockSpec((n_hidden_layers, n_hidden, 1),
                             lambda i: (0, 0, 0)),                            # b_h stack
                pl.BlockSpec((n_hidden, n_out), lambda i: (0, 0)),            # W_out^T
                pl.BlockSpec((n_out, 1), lambda i: (0, 0)),                   # b_out
            ],
            out_specs=pl.BlockSpec((n_out, batch_tile), lambda i: (0, i)),
        ),
        compiler_params=pltpu.CompilerParams(
            dimension_semantics=("parallel",),
        ),
    )(xT, w_in, b_in, wh, bh, w_out_t, b_out)

    # Un-pad and transpose back to (B, N_OUT) (fused under jit).
    return outT[:, :B].T


def init_fcn_params(key, n_input, n_output, n_hidden, n_layers):
    """nn.Linear-style init: U(-1/sqrt(fan_in), +1/sqrt(fan_in)).

    Weights in PyTorch (out_features, in_features) layout; biases as (out, 1).
    """
    ks = jax.random.split(key, 6)

    def uniform(k, shape, fan_in):
        bound = 1.0 / jnp.sqrt(jnp.float32(fan_in))
        return jax.random.uniform(k, shape, jnp.float32, -bound, bound)

    w_in = uniform(ks[0], (n_hidden, n_input), n_input)
    b_in = uniform(ks[1], (n_hidden, 1), n_input)
    wh = uniform(ks[2], (n_layers - 1, n_hidden, n_hidden), n_hidden)
    bh = uniform(ks[3], (n_layers - 1, n_hidden, 1), n_hidden)
    w_out = uniform(ks[4], (n_output, n_hidden), n_hidden)
    b_out = uniform(ks[5], (n_output, 1), n_hidden)
    return (w_in, b_in, wh, bh, w_out, b_out)


def fcn_reference(x, params):
    """Pure-JAX reference (batch-major, PyTorch-style) for correctness checking."""
    w_in, b_in, wh, bh, w_out, b_out = params
    h = jnp.tanh(x @ w_in.T + b_in[:, 0])
    for l in range(wh.shape[0]):
        h = jnp.tanh(h @ wh[l].T + bh[l, :, 0])
    return h @ w_out.T + b_out[:, 0]


if __name__ == "__main__":
    # Shapes matching the module: FCN(1, 1, 32, 3) evaluated on 500 time points.
    N_INPUT, N_OUTPUT, N_HIDDEN, N_LAYERS = 1, 1, 32, 3
    BATCH = 500  # t = linspace(0, 1, 500); padded to 512 internally

    key = jax.random.PRNGKey(0)
    k_x, k_p = jax.random.split(key)

    # x is a column of time values (like torch.tensor(t).view(-1, 1)),
    # plus a dash of noise so the check isn't trivially structured.
    t = jnp.linspace(0.0, 1.0, BATCH, dtype=jnp.float32)
    x = t.reshape(-1, 1)
    x = x + 0.01 * jax.random.normal(k_x, x.shape, jnp.float32)

    params = init_fcn_params(k_p, N_INPUT, N_OUTPUT, N_HIDDEN, N_LAYERS)

    out = fcn_forward(x, params)
    out = jax.block_until_ready(out)

    ref = fcn_reference(x, params)
    assert out.shape == (BATCH, N_OUTPUT)
    assert jnp.allclose(out, ref, atol=1e-5, rtol=1e-5), "mismatch vs reference"

    print("KERNEL_OK")
</pallas_src>

<mosaic_0001>
module attributes {stable_mosaic.version = 11 : i64} {
  func.func @_fcn_kernel(%arg0: i32, %arg1: memref<1x512xf32, #tpu.memory_space<vmem>>, %arg2: memref<32x1xf32, #tpu.memory_space<vmem>>, %arg3: memref<32x1xf32, #tpu.memory_space<vmem>>, %arg4: memref<2x32x32xf32, #tpu.memory_space<vmem>>, %arg5: memref<2x32x1xf32, #tpu.memory_space<vmem>>, %arg6: memref<32x1xf32, #tpu.memory_space<vmem>>, %arg7: memref<1x1xf32, #tpu.memory_space<vmem>>, %arg8: memref<1x512xf32, #tpu.memory_space<vmem>>) attributes {dimension_semantics = [#tpu.dimension_semantics<parallel>], iteration_bounds = array<i64: 1>, scalar_prefetch = 0 : i64, scratch_operands = 0 : i64, tpu.core_type = #tpu.core_type<tc>, window_params = [{transform_indices = @transform_0, window_bounds = array<i64: 1, 512>}, {pipeline_mode = #tpu.pipeline_mode<synchronous>, transform_indices = @transform_1, window_bounds = array<i64: 32, 1>}, {pipeline_mode = #tpu.pipeline_mode<synchronous>, transform_indices = @transform_2, window_bounds = array<i64: 32, 1>}, {pipeline_mode = #tpu.pipeline_mode<synchronous>, transform_indices = @transform_3, window_bounds = array<i64: 2, 32, 32>}, {pipeline_mode = #tpu.pipeline_mode<synchronous>, transform_indices = @transform_4, window_bounds = array<i64: 2, 32, 1>}, {pipeline_mode = #tpu.pipeline_mode<synchronous>, transform_indices = @transform_5, window_bounds = array<i64: 32, 1>}, {pipeline_mode = #tpu.pipeline_mode<synchronous>, transform_indices = @transform_6, window_bounds = array<i64: 1, 1>}, {transform_indices = @transform_7, window_bounds = array<i64: 1, 512>}]} {
    %c0 = arith.constant 0 : index
    %c0_0 = arith.constant 0 : index
    %0 = vector.load %arg1[%c0, %c0_0] : memref<1x512xf32, #tpu.memory_space<vmem>>, vector<1x512xf32>
    %c0_1 = arith.constant 0 : index
    %c0_2 = arith.constant 0 : index
    %1 = vector.load %arg2[%c0_1, %c0_2] : memref<32x1xf32, #tpu.memory_space<vmem>>, vector<32x1xf32>
    %2 = vector.broadcast %1 : vector<32x1xf32> to vector<32x512xf32>
    %3 = vector.broadcast %0 : vector<1x512xf32> to vector<32x512xf32>
    %4 = arith.mulf %2, %3 : vector<32x512xf32>
    %c0_3 = arith.constant 0 : index
    %c0_4 = arith.constant 0 : index
    %5 = vector.load %arg3[%c0_3, %c0_4] : memref<32x1xf32, #tpu.memory_space<vmem>>, vector<32x1xf32>
    %6 = vector.broadcast %5 : vector<32x1xf32> to vector<32x512xf32>
    %7 = arith.addf %4, %6 : vector<32x512xf32>
    %8 = math.tanh %7 : vector<32x512xf32>
    %c0_5 = arith.constant 0 : index
    %c0_6 = arith.constant 0 : index
    %c0_7 = arith.constant 0 : index
    %9 = vector.load %arg4[%c0_5, %c0_6, %c0_7] : memref<2x32x32xf32, #tpu.memory_space<vmem>>, vector<1x32x32xf32>
    %10 = vector.shape_cast %9 : vector<1x32x32xf32> to vector<32x32xf32>
    %cst = arith.constant dense<0.000000e+00> : vector<32x512xf32>
    %11 = tpu.matmul %10, %8, %cst {dimension_numbers = #tpu.dot_dimension_numbers<[1], [0], [0], [1], [0, 0, 1, 1], [], []>} : vector<32x32xf32>, vector<32x512xf32>, vector<32x512xf32> -> vector<32x512xf32>
    %c0_8 = arith.constant 0 : index
    %c0_9 = arith.constant 0 : index
    %c0_10 = arith.constant 0 : index
    %12 = vector.load %arg5[%c0_8, %c0_9, %c0_10] : memref<2x32x1xf32, #tpu.memory_space<vmem>>, vector<1x32x1xf32>
    %13 = vector.shape_cast %12 : vector<1x32x1xf32> to vector<32x1xf32>
    %14 = vector.broadcast %13 : vector<32x1xf32> to vector<32x512xf32>
    %15 = arith.addf %11, %14 : vector<32x512xf32>
    %16 = math.tanh %15 : vector<32x512xf32>
    %c1 = arith.constant 1 : index
    %c0_11 = arith.constant 0 : index
    %c0_12 = arith.constant 0 : index
    %17 = vector.load %arg4[%c1, %c0_11, %c0_12] : memref<2x32x32xf32, #tpu.memory_space<vmem>>, vector<1x32x32xf32>
    %18 = vector.shape_cast %17 : vector<1x32x32xf32> to vector<32x32xf32>
    %cst_13 = arith.constant dense<0.000000e+00> : vector<32x512xf32>
    %19 = tpu.matmul %18, %16, %cst_13 {dimension_numbers = #tpu.dot_dimension_numbers<[1], [0], [0], [1], [0, 0, 1, 1], [], []>} : vector<32x32xf32>, vector<32x512xf32>, vector<32x512xf32> -> vector<32x512xf32>
    %c1_14 = arith.constant 1 : index
    %c0_15 = arith.constant 0 : index
    %c0_16 = arith.constant 0 : index
    %20 = vector.load %arg5[%c1_14, %c0_15, %c0_16] : memref<2x32x1xf32, #tpu.memory_space<vmem>>, vector<1x32x1xf32>
    %21 = vector.shape_cast %20 : vector<1x32x1xf32> to vector<32x1xf32>
    %22 = vector.broadcast %21 : vector<32x1xf32> to vector<32x512xf32>
    %23 = arith.addf %19, %22 : vector<32x512xf32>
    %24 = math.tanh %23 : vector<32x512xf32>
    %c0_17 = arith.constant 0 : index
    %c0_18 = arith.constant 0 : index
    %25 = vector.load %arg6[%c0_17, %c0_18] : memref<32x1xf32, #tpu.memory_space<vmem>>, vector<32x1xf32>
    %26 = vector.broadcast %25 : vector<32x1xf32> to vector<32x512xf32>
    %27 = arith.mulf %26, %24 : vector<32x512xf32>
    %cst_19 = arith.constant dense<0.000000e+00> : vector<512xf32>
    %28 = vector.multi_reduction <add>, %27, %cst_19 [0] : vector<32x512xf32> to vector<512xf32>
    %29 = vector.shape_cast %28 : vector<512xf32> to vector<1x512xf32>
    %c0_20 = arith.constant 0 : index
    %c0_21 = arith.constant 0 : index
    %30 = vector.load %arg7[%c0_20, %c0_21] : memref<1x1xf32, #tpu.memory_space<vmem>>, vector<1x1xf32>
    %31 = vector.broadcast %30 : vector<1x1xf32> to vector<1x512xf32>
    %32 = arith.addf %29, %31 : vector<1x512xf32>
    %c0_22 = arith.constant 0 : index
    %c0_23 = arith.constant 0 : index
    %33 = vector.load %arg8[%c0_22, %c0_23] : memref<1x512xf32, #tpu.memory_space<vmem>>, vector<1x512xf32>
    tpu.vector_store %arg8[%c0_22, %c0_23], %32 {strides = array<i32>} : memref<1x512xf32, #tpu.memory_space<vmem>>, vector<1x512xf32>,
    return
  }
  func.func @transform_0(%arg0: i32) -> (i32, i32) {
    %c0_i32 = arith.constant 0 : i32
    %c0_i32_0 = arith.constant 0 : i32
    return %c0_i32, %arg0 : i32, i32
  }
  func.func @transform_1(%arg0: i32) -> (i32, i32) {
    %c0_i32 = arith.constant 0 : i32
    %c0_i32_0 = arith.constant 0 : i32
    %c0_i32_1 = arith.constant 0 : i32
    return %c0_i32, %c0_i32_0 : i32, i32
  }
  func.func @transform_2(%arg0: i32) -> (i32, i32) {
    %c0_i32 = arith.constant 0 : i32
    %c0_i32_0 = arith.constant 0 : i32
    %c0_i32_1 = arith.constant 0 : i32
    return %c0_i32, %c0_i32_0 : i32, i32
  }
  func.func @transform_3(%arg0: i32) -> (i32, i32, i32) {
    %c0_i32 = arith.constant 0 : i32
    %c0_i32_0 = arith.constant 0 : i32
    %c0_i32_1 = arith.constant 0 : i32
    %c0_i32_2 = arith.constant 0 : i32
    return %c0_i32, %c0_i32_0, %c0_i32_1 : i32, i32, i32
  }
  func.func @transform_4(%arg0: i32) -> (i32, i32, i32) {
    %c0_i32 = arith.constant 0 : i32
    %c0_i32_0 = arith.constant 0 : i32
    %c0_i32_1 = arith.constant 0 : i32
    %c0_i32_2 = arith.constant 0 : i32
    return %c0_i32, %c0_i32_0, %c0_i32_1 : i32, i32, i32
  }
  func.func @transform_5(%arg0: i32) -> (i32, i32) {
    %c0_i32 = arith.constant 0 : i32
    %c0_i32_0 = arith.constant 0 : i32
    %c0_i32_1 = arith.constant 0 : i32
    return %c0_i32, %c0_i32_0 : i32, i32
  }
  func.func @transform_6(%arg0: i32) -> (i32, i32) {
    %c0_i32 = arith.constant 0 : i32
    %c0_i32_0 = arith.constant 0 : i32
    %c0_i32_1 = arith.constant 0 : i32
    return %c0_i32, %c0_i32_0 : i32, i32
  }
  func.func @transform_7(%arg0: i32) -> (i32, i32) {
    %c0_i32 = arith.constant 0 : i32
    %c0_i32_0 = arith.constant 0 : i32
    return %c0_i32, %arg0 : i32, i32
  }
}

</mosaic_0001>

<llo_original>
// kernel: fcn_forward.1
$region0: #{fcn_forward.1}
  #allocation0 [shape = 'u32[]', space=smem, size = 0x4, offset = 0x4, fixed_abs, tag = 'smem constant byte address 0x4 - core index']
  #allocation1 [shape = 'u32[144,128]{1,0:T(1,128)}', space=vmem, size = 0x12000, scoped, tag = 'internal scratch']
  #allocation2 [shape = 'f32[1,1]{1,0:T(1,128)S(1)}', space=vmem, size = 0x200, scoped, tag = 'scoped memory for fcn_forward.1']
  %s0 = inlined_call_operand.vmem [shape: f32[1,512], index: 0, kind: input, shape index: {}]
  %s1 = inlined_call_operand.vmem [shape: f32[32,1], index: 1, kind: input, shape index: {}]
  %s2 = inlined_call_operand.vmem [shape: f32[32,1], index: 2, kind: input, shape index: {}]
  %s3 = inlined_call_operand.vmem [shape: f32[2,32,32], index: 3, kind: input, shape index: {}]
  %s4 = inlined_call_operand.vmem [shape: f32[2,32,1], index: 4, kind: input, shape index: {}]
  %s5 = inlined_call_operand.vmem [shape: f32[32,1], index: 5, kind: input, shape index: {}]
  %s6 = inlined_call_operand.<no memory space> [shape: f32[1,1], index: 6, kind: input, shape index: {}]
  %s7 = inlined_call_operand.vmem [shape: f32[1,512], index: 7, kind: output, shape index: {}]
  %s8 = sld [smem:[#allocation0]]
  $region38: #{fcn_forward.1} parent=0
    _
  %s10 = ssub.s32 1, %s8
  %s11 = scalar_select 0, %s10, %s8
  %v12 = vstv %s6
  %13 = vst [vmem:[#allocation2] sm:$0x1] %v12
  // Predicated region
  $region2: #{fcn_forward.1} parent=0 // pred_check
    _
  $region3: #{fcn_forward.1} parent=0 // pred_check_branch
    %15 = sbr.rel (0) target = $region5
  $region4: #{fcn_forward.1} parent=0 // pred_region
    _
  $region5: #{fcn_forward.1} parent=0 // pred_fallthru
    _
  // Predicated region
  $region6: #{fcn_forward.1} parent=0 // pred_check
    _
  $region7: #{fcn_forward.1} parent=0 // pred_check_branch
    %17 = sbr.rel (0) target = $region9
  $region8: #{fcn_forward.1} parent=0 // pred_region
    _
  $region9: #{fcn_forward.1} parent=0 // pred_fallthru
    _
  // Predicated region
  $region10: #{fcn_forward.1} parent=0 // pred_check
    _
  $region11: #{fcn_forward.1} parent=0 // pred_check_branch
    %19 = sbr.rel (0) target = $region13
  $region12: #{fcn_forward.1} parent=0 // pred_region
    _
  $region13: #{fcn_forward.1} parent=0 // pred_fallthru
    _
  // Predicated region
  $region14: #{fcn_forward.1} parent=0 // pred_check
    _
  $region15: #{fcn_forward.1} parent=0 // pred_check_branch
    %21 = sbr.rel (0) target = $region17
  $region16: #{fcn_forward.1} parent=0 // pred_region
    _
  $region17: #{fcn_forward.1} parent=0 // pred_fallthru
    _
  // Predicated region
  $region18: #{fcn_forward.1} parent=0 // pred_check
    _
  $region19: #{fcn_forward.1} parent=0 // pred_check_branch
    %23 = sbr.rel (0) target = $region21
  $region20: #{fcn_forward.1} parent=0 // pred_region
    _
  $region21: #{fcn_forward.1} parent=0 // pred_fallthru
    _
  // Predicated region
  $region22: #{fcn_forward.1} parent=0 // pred_check
    _
  $region23: #{fcn_forward.1} parent=0 // pred_check_branch
    %25 = sbr.rel (0) target = $region25
  $region24: #{fcn_forward.1} parent=0 // pred_region
    _
  $region25: #{fcn_forward.1} parent=0 // pred_fallthru
    _
  // Predicated region
  $region26: #{fcn_forward.1} parent=0 // pred_check
    _
  $region27: #{fcn_forward.1} parent=0 // pred_check_branch
    %27 = sbr.rel (0) target = $region29
  $region28: #{fcn_forward.1} parent=0 // pred_region
    _
  $region29: #{fcn_forward.1} parent=0 // pred_fallthru
    _
  %v28 = vld [vmem:[%s0] sm:$0xf]
  %v29 = vld [vmem:[%s1] sm:$0xff]
  %v30 = vld [vmem:[%s1 + $0x8] sm:$0xff]
  %v31 = vld [vmem:[%s1 + $0x10] sm:$0xff]
  %v32 = vld [vmem:[%s1 + $0x18] sm:$0xff]
  %34 = vset.pattern.permute.xlu0 0
  %35 = vperm.xlu0 %34, %v29
  %v36 = vpop.permute.xlu0 %35
  %39 = vset.pattern.permute.xlu0 0
  %40 = vperm.xlu0 %39, %v30
  %v41 = vpop.permute.xlu0 %40
  %44 = vset.pattern.permute.xlu0 0
  %45 = vperm.xlu0 %44, %v31
  %v46 = vpop.permute.xlu0 %45
  %49 = vset.pattern.permute.xlu0 0
  %50 = vperm.xlu0 %49, %v32
  %v51 = vpop.permute.xlu0 %50
  %v54 = vlaneseq
  %v55 = vshrl.u32 %v54, 7
  %v56 = vsub.s32 0, %v55
  %v57 = vrot.slane %v28, %v56
  %v58 = vlaneseq
  %v59 = vshrl.u32 %v58, 7
  %v60 = vsub.s32 1, %v59
  %v61 = vrot.slane %v28, %v60
  %v62 = vlaneseq
  %v63 = vshrl.u32 %v62, 7
  %v64 = vsub.s32 2, %v63
  %v65 = vrot.slane %v28, %v64
  %v66 = vlaneseq
  %v67 = vshrl.u32 %v66, 7
  %v68 = vsub.s32 3, %v67
  %v69 = vrot.slane %v28, %v68
  %v74 = vmul.f32 %v36, %v57
  %v75 = vmul.f32 %v36, %v61
  %v76 = vmul.f32 %v36, %v65
  %v77 = vmul.f32 %v36, %v69
  %v78 = vmul.f32 %v41, %v57
  %v79 = vmul.f32 %v41, %v61
  %v80 = vmul.f32 %v41, %v65
  %v81 = vmul.f32 %v41, %v69
  %v82 = vmul.f32 %v46, %v57
  %v83 = vmul.f32 %v46, %v61
  %v84 = vmul.f32 %v46, %v65
  %v85 = vmul.f32 %v46, %v69
  %v86 = vmul.f32 %v51, %v57
  %v87 = vmul.f32 %v51, %v61
  %v88 = vmul.f32 %v51, %v65
  %v89 = vmul.f32 %v51, %v69
  %v90 = vld [vmem:[%s2] sm:$0xff]
  %v91 = vld [vmem:[%s2 + $0x8] sm:$0xff]
  %v92 = vld [vmem:[%s2 + $0x10] sm:$0xff]
  %v93 = vld [vmem:[%s2 + $0x18] sm:$0xff]
  %95 = vset.pattern.permute.xlu0 0
  %96 = vperm.xlu0 %95, %v90
  %v97 = vpop.permute.xlu0 %96
  %100 = vset.pattern.permute.xlu0 0
  %101 = vperm.xlu0 %100, %v91
  %v102 = vpop.permute.xlu0 %101
  %105 = vset.pattern.permute.xlu0 0
  %106 = vperm.xlu0 %105, %v92
  %v107 = vpop.permute.xlu0 %106
  %110 = vset.pattern.permute.xlu0 0
  %111 = vperm.xlu0 %110, %v93
  %v112 = vpop.permute.xlu0 %111
  %v114 = vadd.f32 %v74, %v97
  %v115 = vadd.f32 %v75, %v97
  %v116 = vadd.f32 %v76, %v97
  %v117 = vadd.f32 %v77, %v97
  %v118 = vadd.f32 %v78, %v102
  %v119 = vadd.f32 %v79, %v102
  %v120 = vadd.f32 %v80, %v102
  %v121 = vadd.f32 %v81, %v102
  %v122 = vadd.f32 %v82, %v107
  %v123 = vadd.f32 %v83, %v107
  %v124 = vadd.f32 %v84, %v107
  %v125 = vadd.f32 %v85, %v107
  %v126 = vadd.f32 %v86, %v112
  %v127 = vadd.f32 %v87, %v112
  %v128 = vadd.f32 %v88, %v112
  %v129 = vadd.f32 %v89, %v112
  %v130 = vtanh.pop %v114
  %v131 = vtanh.pop %v115
  %v132 = vtanh.pop %v116
  %v133 = vtanh.pop %v117
  %v134 = vtanh.pop %v118
  %v135 = vtanh.pop %v119
  %v136 = vtanh.pop %v120
  %v137 = vtanh.pop %v121
  %v138 = vtanh.pop %v122
  %v139 = vtanh.pop %v123
  %v140 = vtanh.pop %v124
  %v141 = vtanh.pop %v125
  %v142 = vtanh.pop %v126
  %v143 = vtanh.pop %v127
  %v144 = vtanh.pop %v128
  %v145 = vtanh.pop %v129
  %v146 = vld [vmem:[%s3] sm:$0xff]
  %v147 = vld [vmem:[%s3 + $0x8] sm:$0xff]
  %v148 = vld [vmem:[%s3 + $0x10] sm:$0xff]
  %v149 = vld [vmem:[%s3 + $0x18] sm:$0xff]
  %v150 = vld [vmem:[%s4] sm:$0xff]
  %v151 = vld [vmem:[%s4 + $0x8] sm:$0xff]
  %v152 = vld [vmem:[%s4 + $0x10] sm:$0xff]
  %v153 = vld [vmem:[%s4 + $0x18] sm:$0xff]
  %155 = vset.pattern.permute.xlu0 0
  %156 = vperm.xlu0 %155, %v150
  %v157 = vpop.permute.xlu0 %156
  %160 = vset.pattern.permute.xlu0 0
  %161 = vperm.xlu0 %160, %v151
  %v162 = vpop.permute.xlu0 %161
  %165 = vset.pattern.permute.xlu0 0
  %166 = vperm.xlu0 %165, %v152
  %v167 = vpop.permute.xlu0 %166
  %170 = vset.pattern.permute.xlu0 0
  %171 = vperm.xlu0 %170, %v153
  %v172 = vpop.permute.xlu0 %171
  %vm174 = vcmask 261120
  %v176 = vsel %vm174, %v146, 0
  %v179 = vsel %vm174, %v147, 0
  %v182 = vsel %vm174, %v148, 0
  %v185 = vsel %vm174, %v149, 0
  %187 = vmatprep.subr.mxu0 0.0
  %188 = vmatpush1.msra.mxu0 0.0
  %189 = vmatprep.subr.mxu0 0.0
  %190 = vmatpush1.msra.mxu0 0.0
  %191 = vmatprep.subr.mxu0 0.0
  %192 = vmatpush1.msra.mxu0 0.0
  %193 = vmatprep.subr.mxu0 0.0
  %194 = vmatpush1.msra.mxu0 0.0
  %195 = vmatprep.subr.mxu0 0.0
  %196 = vmatpush1.msra.mxu0 0.0
  %197 = vmatprep.subr.mxu0 0.0
  %198 = vmatpush1.msra.mxu0 0.0
  %199 = vmatprep.subr.mxu0 0.0
  %200 = vmatpush1.msra.mxu0 0.0
  %201 = vmatprep.subr.mxu0 0.0
  %202 = vmatpush1.msra.mxu0 0.0
  %203 = vmatprep.subr.mxu0 0.0
  %204 = vmatpush1.msra.mxu0 0.0
  %205 = vmatprep.subr.mxu0 0.0
  %206 = vmatpush1.msra.mxu0 0.0
  %207 = vmatprep.subr.mxu0 0.0
  %208 = vmatpush1.msra.mxu0 0.0
  %209 = vmatprep.subr.mxu0 0.0
  %210 = vmatpush1.msra.mxu0 0.0
  %211 = vmatprep.subr.mxu0 %v143
  %212 = vmatpush1.msra.mxu0 %v142
  %213 = vmatprep.subr.mxu0 %v139
  %214 = vmatpush1.msra.mxu0 %v138
  %215 = vmatprep.subr.mxu0 %v135
  %216 = vmatpush1.msra.mxu0 %v134
  %217 = vmatprep.subr.mxu0 %v131
  %218 = vmatpush1.msra.mxu0 %v130
  %219 = vmatprep.subr.mxu0 0.0
  %220 = vmatpush2.msra.mxu0 0.0
  %221 = vmatprep.subr.mxu0 0.0
  %222 = vmatpush2.msra.mxu0 0.0
  %223 = vmatprep.subr.mxu0 0.0
  %224 = vmatpush2.msra.mxu0 0.0
  %225 = vmatprep.subr.mxu0 0.0
  %226 = vmatpush2.msra.mxu0 0.0
  %227 = vmatprep.subr.mxu0 0.0
  %228 = vmatpush2.msra.mxu0 0.0
  %229 = vmatprep.subr.mxu0 0.0
  %230 = vmatpush2.msra.mxu0 0.0
  %231 = vmatprep.subr.mxu0 0.0
  %232 = vmatpush2.msra.mxu0 0.0
  %233 = vmatprep.subr.mxu0 0.0
  %234 = vmatpush2.msra.mxu0 0.0
  %235 = vmatprep.subr.mxu0 0.0
  %236 = vmatpush2.msra.mxu0 0.0
  %237 = vmatprep.subr.mxu0 0.0
  %238 = vmatpush2.msra.mxu0 0.0
  %239 = vmatprep.subr.mxu0 0.0
  %240 = vmatpush2.msra.mxu0 0.0
  %241 = vmatprep.subr.mxu0 0.0
  %242 = vmatpush2.msra.mxu0 0.0
  %243 = vmatprep.subr.mxu0 0.0
  %244 = vmatpush2.msra.mxu0 0.0
  %245 = vmatprep.subr.mxu0 0.0
  %246 = vmatpush2.msra.mxu0 0.0
  %247 = vmatprep.subr.mxu0 0.0
  %248 = vmatpush2.msra.mxu0 0.0
  %249 = vmatprep.subr.mxu0 0.0
  %250 = vmatpush2.msra.mxu0 0.0
  %251 = vmatprep.mubr.f32.mxu0 0.0
  %252 = vmatmul.mubr.f32.gmra.mxu0 %v176
  %v253 = vpop.f32.mrf.mxu0
  %v254 = vadd.f32 %v157, %v253
  %v255 = vpop.f32.mrf.mxu0
  %v256 = vadd.f32 %v157, %v255
  %257 = vmatprep.mubr.f32.mxu0 0.0
  %258 = vmatmul.mubr.f32.gmra.mxu0 %v179
  %v259 = vpop.f32.mrf.mxu0
  %v260 = vadd.f32 %v162, %v259
  %v261 = vpop.f32.mrf.mxu0
  %v262 = vadd.f32 %v162, %v261
  %263 = vmatprep.mubr.f32.mxu0 0.0
  %264 = vmatmul.mubr.f32.gmra.mxu0 %v182
  %v265 = vpop.f32.mrf.mxu0
  %v266 = vadd.f32 %v167, %v265
  %v267 = vpop.f32.mrf.mxu0
  %v268 = vadd.f32 %v167, %v267
  %269 = vmatprep.mubr.f32.mxu0 0.0
  %270 = vmatmul.mubr.f32.gmra.mxu0 %v185
  %v271 = vpop.f32.mrf.mxu0
  %v272 = vadd.f32 %v172, %v271
  %v273 = vpop.f32.mrf.mxu0
  %v274 = vadd.f32 %v172, %v273
  %275 = vdwg.mxu0
  %276 = vmatprep.subr.mxu0 0.0
  %277 = vmatpush1.msra.mxu0 0.0
  %278 = vmatprep.subr.mxu0 0.0
  %279 = vmatpush1.msra.mxu0 0.0
  %280 = vmatprep.subr.mxu0 0.0
  %281 = vmatpush1.msra.mxu0 0.0
  %282 = vmatprep.subr.mxu0 0.0
  %283 = vmatpush1.msra.mxu0 0.0
  %284 = vmatprep.subr.mxu0 0.0
  %285 = vmatpush1.msra.mxu0 0.0
  %286 = vmatprep.subr.mxu0 0.0
  %287 = vmatpush1.msra.mxu0 0.0
  %288 = vmatprep.subr.mxu0 0.0
  %289 = vmatpush1.msra.mxu0 0.0
  %290 = vmatprep.subr.mxu0 0.0
  %291 = vmatpush1.msra.mxu0 0.0
  %292 = vmatprep.subr.mxu0 0.0
  %293 = vmatpush1.msra.mxu0 0.0
  %294 = vmatprep.subr.mxu0 0.0
  %295 = vmatpush1.msra.mxu0 0.0
  %296 = vmatprep.subr.mxu0 0.0
  %297 = vmatpush1.msra.mxu0 0.0
  %298 = vmatprep.subr.mxu0 0.0
  %299 = vmatpush1.msra.mxu0 0.0
  %300 = vmatprep.subr.mxu0 %v145
  %301 = vmatpush1.msra.mxu0 %v144
  %302 = vmatprep.subr.mxu0 %v141
  %303 = vmatpush1.msra.mxu0 %v140
  %304 = vmatprep.subr.mxu0 %v137
  %305 = vmatpush1.msra.mxu0 %v136
  %306 = vmatprep.subr.mxu0 %v133
  %307 = vmatpush1.msra.mxu0 %v132
  %308 = vmatprep.subr.mxu0 0.0
  %309 = vmatpush2.msra.mxu0 0.0
  %310 = vmatprep.subr.mxu0 0.0
  %311 = vmatpush2.msra.mxu0 0.0
  %312 = vmatprep.subr.mxu0 0.0
  %313 = vmatpush2.msra.mxu0 0.0
  %314 = vmatprep.subr.mxu0 0.0
  %315 = vmatpush2.msra.mxu0 0.0
  %316 = vmatprep.subr.mxu0 0.0
  %317 = vmatpush2.msra.mxu0 0.0
  %318 = vmatprep.subr.mxu0 0.0
  %319 = vmatpush2.msra.mxu0 0.0
  %320 = vmatprep.subr.mxu0 0.0
  %321 = vmatpush2.msra.mxu0 0.0
  %322 = vmatprep.subr.mxu0 0.0
  %323 = vmatpush2.msra.mxu0 0.0
  %324 = vmatprep.subr.mxu0 0.0
  %325 = vmatpush2.msra.mxu0 0.0
  %326 = vmatprep.subr.mxu0 0.0
  %327 = vmatpush2.msra.mxu0 0.0
  %328 = vmatprep.subr.mxu0 0.0
  %329 = vmatpush2.msra.mxu0 0.0
  %330 = vmatprep.subr.mxu0 0.0
  %331 = vmatpush2.msra.mxu0 0.0
  %332 = vmatprep.subr.mxu0 0.0
  %333 = vmatpush2.msra.mxu0 0.0
  %334 = vmatprep.subr.mxu0 0.0
  %335 = vmatpush2.msra.mxu0 0.0
  %336 = vmatprep.subr.mxu0 0.0
  %337 = vmatpush2.msra.mxu0 0.0
  %338 = vmatprep.subr.mxu0 0.0
  %339 = vmatpush2.msra.mxu0 0.0
  %340 = vmatprep.mubr.f32.mxu0 0.0
  %341 = vmatmul.mubr.f32.gmra.mxu0 %v176
  %v342 = vpop.f32.mrf.mxu0
  %v343 = vadd.f32 %v157, %v342
  %v344 = vpop.f32.mrf.mxu0
  %v345 = vadd.f32 %v157, %v344
  %346 = vmatprep.mubr.f32.mxu0 0.0
  %347 = vmatmul.mubr.f32.gmra.mxu0 %v179
  %v348 = vpop.f32.mrf.mxu0
  %v349 = vadd.f32 %v162, %v348
  %v350 = vpop.f32.mrf.mxu0
  %v351 = vadd.f32 %v162, %v350
  %352 = vmatprep.mubr.f32.mxu0 0.0
  %353 = vmatmul.mubr.f32.gmra.mxu0 %v182
  %v354 = vpop.f32.mrf.mxu0
  %v355 = vadd.f32 %v167, %v354
  %v356 = vpop.f32.mrf.mxu0
  %v357 = vadd.f32 %v167, %v356
  %358 = vmatprep.mubr.f32.mxu0 0.0
  %359 = vmatmul.mubr.f32.gmra.mxu0 %v185
  %v360 = vpop.f32.mrf.mxu0
  %v361 = vadd.f32 %v172, %v360
  %v362 = vpop.f32.mrf.mxu0
  %v363 = vadd.f32 %v172, %v362
  %364 = vdwg.mxu0
  %v365 = vtanh.pop %v254
  %v366 = vtanh.pop %v256
  %v367 = vtanh.pop %v343
  %v368 = vtanh.pop %v345
  %v369 = vtanh.pop %v260
  %v370 = vtanh.pop %v262
  %v371 = vtanh.pop %v349
  %v372 = vtanh.pop %v351
  %v373 = vtanh.pop %v266
  %v374 = vtanh.pop %v268
  %v375 = vtanh.pop %v355
  %v376 = vtanh.pop %v357
  %v377 = vtanh.pop %v272
  %v378 = vtanh.pop %v274
  %v379 = vtanh.pop %v361
  %v380 = vtanh.pop %v363
  %s381 = scalar_lea.vmem %s3, 32
  %v382 = vld [vmem:[%s381] sm:$0xff]
  %v383 = vld [vmem:[%s381 + $0x8] sm:$0xff]
  %v384 = vld [vmem:[%s381 + $0x10] sm:$0xff]
  %v385 = vld [vmem:[%s381 + $0x18] sm:$0xff]
  %s386 = scalar_lea.vmem %s4, 32
  %v387 = vld [vmem:[%s386] sm:$0xff]
  %v388 = vld [vmem:[%s386 + $0x8] sm:$0xff]
  %v389 = vld [vmem:[%s386 + $0x10] sm:$0xff]
  %v390 = vld [vmem:[%s386 + $0x18] sm:$0xff]
  %392 = vset.pattern.permute.xlu0 0
  %393 = vperm.xlu0 %392, %v387
  %v394 = vpop.permute.xlu0 %393
  %397 = vset.pattern.permute.xlu0 0
  %398 = vperm.xlu0 %397, %v388
  %v399 = vpop.permute.xlu0 %398
  %402 = vset.pattern.permute.xlu0 0
  %403 = vperm.xlu0 %402, %v389
  %v404 = vpop.permute.xlu0 %403
  %407 = vset.pattern.permute.xlu0 0
  %408 = vperm.xlu0 %407, %v390
  %v409 = vpop.permute.xlu0 %408
  %v412 = vsel %vm174, %v382, 0
  %v415 = vsel %vm174, %v383, 0
  %v418 = vsel %vm174, %v384, 0
  %v421 = vsel %vm174, %v385, 0
  %423 = vmatprep.subr.mxu0 0.0
  %424 = vmatpush1.msra.mxu0 0.0
  %425 = vmatprep.subr.mxu0 0.0
  %426 = vmatpush1.msra.mxu0 0.0
  %427 = vmatprep.subr.mxu0 0.0
  %428 = vmatpush1.msra.mxu0 0.0
  %429 = vmatprep.subr.mxu0 0.0
  %430 = vmatpush1.msra.mxu0 0.0
  %431 = vmatprep.subr.mxu0 0.0
  %432 = vmatpush1.msra.mxu0 0.0
  %433 = vmatprep.subr.mxu0 0.0
  %434 = vmatpush1.msra.mxu0 0.0
  %435 = vmatprep.subr.mxu0 0.0
  %436 = vmatpush1.msra.mxu0 0.0
  %437 = vmatprep.subr.mxu0 0.0
  %438 = vmatpush1.msra.mxu0 0.0
  %439 = vmatprep.subr.mxu0 0.0
  %440 = vmatpush1.msra.mxu0 0.0
  %441 = vmatprep.subr.mxu0 0.0
  %442 = vmatpush1.msra.mxu0 0.0
  %443 = vmatprep.subr.mxu0 0.0
  %444 = vmatpush1.msra.mxu0 0.0
  %445 = vmatprep.subr.mxu0 0.0
  %446 = vmatpush1.msra.mxu0 0.0
  %447 = vmatprep.subr.mxu0 %v378
  %448 = vmatpush1.msra.mxu0 %v377
  %449 = vmatprep.subr.mxu0 %v374
  %450 = vmatpush1.msra.mxu0 %v373
  %451 = vmatprep.subr.mxu0 %v370
  %452 = vmatpush1.msra.mxu0 %v369
  %453 = vmatprep.subr.mxu0 %v366
  %454 = vmatpush1.msra.mxu0 %v365
  %455 = vmatprep.subr.mxu0 0.0
  %456 = vmatpush2.msra.mxu0 0.0
  %457 = vmatprep.subr.mxu0 0.0
  %458 = vmatpush2.msra.mxu0 0.0
  %459 = vmatprep.subr.mxu0 0.0
  %460 = vmatpush2.msra.mxu0 0.0
  %461 = vmatprep.subr.mxu0 0.0
  %462 = vmatpush2.msra.mxu0 0.0
  %463 = vmatprep.subr.mxu0 0.0
  %464 = vmatpush2.msra.mxu0 0.0
  %465 = vmatprep.subr.mxu0 0.0
  %466 = vmatpush2.msra.mxu0 0.0
  %467 = vmatprep.subr.mxu0 0.0
  %468 = vmatpush2.msra.mxu0 0.0
  %469 = vmatprep.subr.mxu0 0.0
  %470 = vmatpush2.msra.mxu0 0.0
  %471 = vmatprep.subr.mxu0 0.0
  %472 = vmatpush2.msra.mxu0 0.0
  %473 = vmatprep.subr.mxu0 0.0
  %474 = vmatpush2.msra.mxu0 0.0
  %475 = vmatprep.subr.mxu0 0.0
  %476 = vmatpush2.msra.mxu0 0.0
  %477 = vmatprep.subr.mxu0 0.0
  %478 = vmatpush2.msra.mxu0 0.0
  %479 = vmatprep.subr.mxu0 0.0
  %480 = vmatpush2.msra.mxu0 0.0
  %481 = vmatprep.subr.mxu0 0.0
  %482 = vmatpush2.msra.mxu0 0.0
  %483 = vmatprep.subr.mxu0 0.0
  %484 = vmatpush2.msra.mxu0 0.0
  %485 = vmatprep.subr.mxu0 0.0
  %486 = vmatpush2.msra.mxu0 0.0
  %487 = vmatprep.mubr.f32.mxu0 0.0
  %488 = vmatmul.mubr.f32.gmra.mxu0 %v412
  %v489 = vpop.f32.mrf.mxu0
  %v490 = vadd.f32 %v394, %v489
  %v491 = vpop.f32.mrf.mxu0
  %v492 = vadd.f32 %v394, %v491
  %493 = vmatprep.mubr.f32.mxu0 0.0
  %494 = vmatmul.mubr.f32.gmra.mxu0 %v415
  %v495 = vpop.f32.mrf.mxu0
  %v496 = vadd.f32 %v399, %v495
  %v497 = vpop.f32.mrf.mxu0
  %v498 = vadd.f32 %v399, %v497
  %499 = vmatprep.mubr.f32.mxu0 0.0
  %500 = vmatmul.mubr.f32.gmra.mxu0 %v418
  %v501 = vpop.f32.mrf.mxu0
  %v502 = vadd.f32 %v404, %v501
  %v503 = vpop.f32.mrf.mxu0
  %v504 = vadd.f32 %v404, %v503
  %505 = vmatprep.mubr.f32.mxu0 0.0
  %506 = vmatmul.mubr.f32.gmra.mxu0 %v421
  %v507 = vpop.f32.mrf.mxu0
  %v508 = vadd.f32 %v409, %v507
  %v509 = vpop.f32.mrf.mxu0
  %v510 = vadd.f32 %v409, %v509
  %511 = vdwg.mxu0
  %512 = vmatprep.subr.mxu0 0.0
  %513 = vmatpush1.msra.mxu0 0.0
  %514 = vmatprep.subr.mxu0 0.0
  %515 = vmatpush1.msra.mxu0 0.0
  %516 = vmatprep.subr.mxu0 0.0
  %517 = vmatpush1.msra.mxu0 0.0
  %518 = vmatprep.subr.mxu0 0.0
  %519 = vmatpush1.msra.mxu0 0.0
  %520 = vmatprep.subr.mxu0 0.0
  %521 = vmatpush1.msra.mxu0 0.0
  %522 = vmatprep.subr.mxu0 0.0
  %523 = vmatpush1.msra.mxu0 0.0
  %524 = vmatprep.subr.mxu0 0.0
  %525 = vmatpush1.msra.mxu0 0.0
  %526 = vmatprep.subr.mxu0 0.0
  %527 = vmatpush1.msra.mxu0 0.0
  %528 = vmatprep.subr.mxu0 0.0
  %529 = vmatpush1.msra.mxu0 0.0
  %530 = vmatprep.subr.mxu0 0.0
  %531 = vmatpush1.msra.mxu0 0.0
  %532 = vmatprep.subr.mxu0 0.0
  %533 = vmatpush1.msra.mxu0 0.0
  %534 = vmatprep.subr.mxu0 0.0
  %535 = vmatpush1.msra.mxu0 0.0
  %536 = vmatprep.subr.mxu0 %v380
  %537 = vmatpush1.msra.mxu0 %v379
  %538 = vmatprep.subr.mxu0 %v376
  %539 = vmatpush1.msra.mxu0 %v375
  %540 = vmatprep.subr.mxu0 %v372
  %541 = vmatpush1.msra.mxu0 %v371
  %542 = vmatprep.subr.mxu0 %v368
  %543 = vmatpush1.msra.mxu0 %v367
  %544 = vmatprep.subr.mxu0 0.0
  %545 = vmatpush2.msra.mxu0 0.0
  %546 = vmatprep.subr.mxu0 0.0
  %547 = vmatpush2.msra.mxu0 0.0
  %548 = vmatprep.subr.mxu0 0.0
  %549 = vmatpush2.msra.mxu0 0.0
  %550 = vmatprep.subr.mxu0 0.0
  %551 = vmatpush2.msra.mxu0 0.0
  %552 = vmatprep.subr.mxu0 0.0
  %553 = vmatpush2.msra.mxu0 0.0
  %554 = vmatprep.subr.mxu0 0.0
  %555 = vmatpush2.msra.mxu0 0.0
  %556 = vmatprep.subr.mxu0 0.0
  %557 = vmatpush2.msra.mxu0 0.0
  %558 = vmatprep.subr.mxu0 0.0
  %559 = vmatpush2.msra.mxu0 0.0
  %560 = vmatprep.subr.mxu0 0.0
  %561 = vmatpush2.msra.mxu0 0.0
  %562 = vmatprep.subr.mxu0 0.0
  %563 = vmatpush2.msra.mxu0 0.0
  %564 = vmatprep.subr.mxu0 0.0
  %565 = vmatpush2.msra.mxu0 0.0
  %566 = vmatprep.subr.mxu0 0.0
  %567 = vmatpush2.msra.mxu0 0.0
  %568 = vmatprep.subr.mxu0 0.0
  %569 = vmatpush2.msra.mxu0 0.0
  %570 = vmatprep.subr.mxu0 0.0
  %571 = vmatpush2.msra.mxu0 0.0
  %572 = vmatprep.subr.mxu0 0.0
  %573 = vmatpush2.msra.mxu0 0.0
  %574 = vmatprep.subr.mxu0 0.0
  %575 = vmatpush2.msra.mxu0 0.0
  %576 = vmatprep.mubr.f32.mxu0 0.0
  %577 = vmatmul.mubr.f32.gmra.mxu0 %v412
  %v578 = vpop.f32.mrf.mxu0
  %v579 = vadd.f32 %v394, %v578
  %v580 = vpop.f32.mrf.mxu0
  %v581 = vadd.f32 %v394, %v580
  %582 = vmatprep.mubr.f32.mxu0 0.0
  %583 = vmatmul.mubr.f32.gmra.mxu0 %v415
  %v584 = vpop.f32.mrf.mxu0
  %v585 = vadd.f32 %v399, %v584
  %v586 = vpop.f32.mrf.mxu0
  %v587 = vadd.f32 %v399, %v586
  %588 = vmatprep.mubr.f32.mxu0 0.0
  %589 = vmatmul.mubr.f32.gmra.mxu0 %v418
  %v590 = vpop.f32.mrf.mxu0
  %v591 = vadd.f32 %v404, %v590
  %v592 = vpop.f32.mrf.mxu0
  %v593 = vadd.f32 %v404, %v592
  %594 = vmatprep.mubr.f32.mxu0 0.0
  %595 = vmatmul.mubr.f32.gmra.mxu0 %v421
  %v596 = vpop.f32.mrf.mxu0
  %v597 = vadd.f32 %v409, %v596
  %v598 = vpop.f32.mrf.mxu0
  %v599 = vadd.f32 %v409, %v598
  %600 = vdwg.mxu0
  %v601 = vtanh.pop %v490
  %v602 = vtanh.pop %v492
  %v603 = vtanh.pop %v579
  %v604 = vtanh.pop %v581
  %v605 = vtanh.pop %v496
  %v606 = vtanh.pop %v498
  %v607 = vtanh.pop %v585
  %v608 = vtanh.pop %v587
  %v609 = vtanh.pop %v502
  %v610 = vtanh.pop %v504
  %v611 = vtanh.pop %v591
  %v612 = vtanh.pop %v593
  %v613 = vtanh.pop %v508
  %v614 = vtanh.pop %v510
  %v615 = vtanh.pop %v597
  %v616 = vtanh.pop %v599
  %v617 = vld [vmem:[%s5] sm:$0xff]
  %v618 = vld [vmem:[%s5 + $0x8] sm:$0xff]
  %v619 = vld [vmem:[%s5 + $0x10] sm:$0xff]
  %v620 = vld [vmem:[%s5 + $0x18] sm:$0xff]
  %622 = vset.pattern.permute.xlu0 0
  %623 = vperm.xlu0 %622, %v617
  %v624 = vpop.permute.xlu0 %623
  %627 = vset.pattern.permute.xlu0 0
  %628 = vperm.xlu0 %627, %v618
  %v629 = vpop.permute.xlu0 %628
  %632 = vset.pattern.permute.xlu0 0
  %633 = vperm.xlu0 %632, %v619
  %v634 = vpop.permute.xlu0 %633
  %637 = vset.pattern.permute.xlu0 0
  %638 = vperm.xlu0 %637, %v620
  %v639 = vpop.permute.xlu0 %638
  %v641 = vmul.f32 %v624, %v601
  %v642 = vmul.f32 %v624, %v602
  %v643 = vmul.f32 %v624, %v603
  %v644 = vmul.f32 %v624, %v604
  %v645 = vmul.f32 %v629, %v605
  %v646 = vmul.f32 %v629, %v606
  %v647 = vmul.f32 %v629, %v607
  %v648 = vmul.f32 %v629, %v608
  %v649 = vmul.f32 %v634, %v609
  %v650 = vmul.f32 %v634, %v610
  %v651 = vmul.f32 %v634, %v611
  %v652 = vmul.f32 %v634, %v612
  %v653 = vmul.f32 %v639, %v613
  %v654 = vmul.f32 %v639, %v614
  %v655 = vmul.f32 %v639, %v615
  %v656 = vmul.f32 %v639, %v616
  %v657 = vadd.f32 %v641, %v645
  %v658 = vadd.f32 %v657, %v649
  %v659 = vadd.f32 %v658, %v653
  %v660 = vrot.slane %v659, 4
  %v661 = vadd.f32 %v659, %v660
  %v662 = vrot.slane %v661, 2
  %v663 = vadd.f32 %v661, %v662
  %v664 = vrot.slane %v663, 1
  %v665 = vadd.f32 %v663, %v664
  %v666 = vadd.f32 %v642, %v646
  %v667 = vadd.f32 %v666, %v650
  %v668 = vadd.f32 %v667, %v654
  %v669 = vrot.slane %v668, 4
  %v670 = vadd.f32 %v668, %v669
  %v671 = vrot.slane %v670, 2
  %v672 = vadd.f32 %v670, %v671
  %v673 = vrot.slane %v672, 1
  %v674 = vadd.f32 %v672, %v673
  %v675 = vadd.f32 %v643, %v647
  %v676 = vadd.f32 %v675, %v651
  %v677 = vadd.f32 %v676, %v655
  %v678 = vrot.slane %v677, 4
  %v679 = vadd.f32 %v677, %v678
  %v680 = vrot.slane %v679, 2
  %v681 = vadd.f32 %v679, %v680
  %v682 = vrot.slane %v681, 1
  %v683 = vadd.f32 %v681, %v682
  %v684 = vadd.f32 %v644, %v648
  %v685 = vadd.f32 %v684, %v652
  %v686 = vadd.f32 %v685, %v656
  %v687 = vrot.slane %v686, 4
  %v688 = vadd.f32 %v686, %v687
  %v689 = vrot.slane %v688, 2
  %v690 = vadd.f32 %v688, %v689
  %v691 = vrot.slane %v690, 1
  %v692 = vadd.f32 %v690, %v691
  %v693 = vld [vmem:[#allocation2] sm:$0x1]
  %695 = vset.pattern.permute.xlu0 0
  %696 = vperm.xlu0 %695, %v693
  %v697 = vpop.permute.xlu0 %696
  %v699 = vlaneseq
  %v700 = vshrl.u32 %v699, 7
  %v701 = vsub.s32 0, %v700
  %v702 = vrot.slane %v697, %v701
  %v703 = vadd.f32 %v665, %v702
  %v704 = vadd.f32 %v674, %v702
  %v705 = vadd.f32 %v683, %v702
  %v706 = vadd.f32 %v692, %v702
  %v711 = vcombine.low %v703, %v704
  %v712 = vcombine.low %v705, %v706
  %v714 = vunpack.c.l.s4 1966171168
  %v715 = vunpack.c.0.s8 %v714
  %v716 = vlaneseq
  %v717 = vshrl.u32 %v716, 7
  %v718 = vsub.s32 %v715, %v717
  %v719 = vrot.slane %v711, %v718
  %v721 = vunpack.c.l.s4 1966171168
  %v722 = vunpack.c.0.s8 %v721
  %v723 = vlaneseq
  %v724 = vshrl.u32 %v723, 7
  %v725 = vsub.s32 %v722, %v724
  %v726 = vrot.slane %v712, %v725
  %v727 = vcombine.low %v719, %v726
  %v729 = vunpack.c.l.s4 1966171168
  %v730 = vunpack.c.0.s8 %v729
  %v731 = vlaneseq
  %v732 = vshrl.u32 %v731, 7
  %v733 = vsub.s32 %v730, %v732
  %v734 = vrot.slane %v727, %v733
  %v736 = vlaneseq
  %vm737 = vcmp.ge.s32.totalorder %v736, 0
  %vm738 = vcmp.lt.s32.totalorder %v736, 512
  %vm739 = vmand %vm737, %vm738
  %740 = vst.msk [vmem:[%s7] sm:$0xf] %vm739, %v734
  // Predicated region
  $region30: #{fcn_forward.1} parent=0 // pred_check
    _
  $region31: #{fcn_forward.1} parent=0 // pred_check_branch
    %742 = sbr.rel (0) target = $region33
  $region32: #{fcn_forward.1} parent=0 // pred_region
    _
  $region33: #{fcn_forward.1} parent=0 // pred_fallthru
    _
  // Predicated region
  $region34: #{fcn_forward.1} parent=0 // pred_check
    _
  $region35: #{fcn_forward.1} parent=0 // pred_check_branch
    %744 = sbr.rel (0) target = $region37
  $region36: #{fcn_forward.1} parent=0 // pred_region
    _
  $region37: #{fcn_forward.1} parent=0 // pred_fallthru
    _

</llo_original>
